<compile_context>
chip_gen: v7x
topology: tpu7x:2x2x1
jax: 0.10.0
libtpu: 0.0.40
codegen_flags: <defaults>
</compile_context>

<pallas_src>
import jax
import jax.numpy as jnp
from jax.experimental import pallas as pl
from jax.experimental.pallas import tpu as pltpu


def mlp_kernel(x_ref, w1_ref, b1_ref, w2_ref, b2_ref, w3_ref, b3_ref, o_ref):
    x = x_ref[...]                                              # (1, TM) batch on lanes

    # Layer 1: Linear(1 -> 64) == outer product -> VPU broadcast mul-add + ReLU.
    h1 = jnp.maximum(w1_ref[...] * x + b1_ref[...], 0.0)       # (64, TM)

    # Layer 2: Linear(64 -> 64) on the MXU: (64,64) @ (64,TM), f32 accumulate.
    h2 = jnp.dot(w2_ref[...], h1, preferred_element_type=jnp.float32)
    h2 = jnp.maximum(h2 + b2_ref[...], 0.0)                    # (64, TM)

    # Layer 3: Linear(64 -> 1) == weighted sublane reduce; bias from SMEM.
    out = jnp.sum(w3_ref[...] * h2, axis=0, keepdims=True) + b3_ref[0]
    o_ref[...] = out.astype(o_ref.dtype)                       # (1, TM)


def _pick_tm(N):
    """Pick a lane-dense batch tile: multiple of 128, large to amortize
    per-grid-step overhead, but with >=2 parallel steps when possible so
    both v7x TensorCores are used."""
    for cand in (2048, 1024, 512, 256, 128):
        if N % cand == 0:
            tm = cand
            break
    else:
        raise ValueError("N must be a multiple of 128")
    if N // tm == 1 and tm > 128:
        tm //= 2  # give megacore (v7x) two parallel steps
    return tm


def neural_net_forward(x, params, *, tm=None):
    """x: (N, 1) float32. params: dict of w1,b1,w2,b2,w3,b3 (weights as (in, out))."""
    N, F = x.shape
    assert F == 1
    assert N % 128 == 0, "pad batch to a multiple of 128 (caller slices padding off)"
    if tm is None:
        tm = _pick_tm(N)
    assert tm % 128 == 0 and N % tm == 0
    H = params["w1"].shape[1]

    # Feature-major (transposed) parameter layout for the batch-on-lanes kernel.
    x_t = x.reshape(1, N)                       # batch on lanes
    w1c = params["w1"].T                        # (H, 1)
    b1c = params["b1"].reshape(H, 1)            # (H, 1)
    w2m = params["w2"].T                        # (out, in) = (H, H): h2 = w2m @ h1
    b2c = params["b2"].reshape(H, 1)            # (H, 1)
    w3c = params["w3"]                          # (H, 1)
    b3s = params["b3"].reshape(1)               # scalar -> SMEM

    grid = (N // tm,)
    out_t = pl.pallas_call(
        mlp_kernel,
        out_shape=jax.ShapeDtypeStruct((1, N), jnp.float32),
        grid_spec=pltpu.PrefetchScalarGridSpec(
            num_scalar_prefetch=0,
            grid=grid,
            in_specs=[
                pl.BlockSpec((1, tm), lambda i: (0, i)),              # x tile (lane-dense)
                pl.BlockSpec((H, 1), lambda i: (0, 0)),               # w1 column
                pl.BlockSpec((H, 1), lambda i: (0, 0)),               # b1 column
                pl.BlockSpec((H, H), lambda i: (0, 0)),               # w2 (out, in)
                pl.BlockSpec((H, 1), lambda i: (0, 0)),               # b2 column
                pl.BlockSpec((H, 1), lambda i: (0, 0)),               # w3 column
                pl.BlockSpec(memory_space=pltpu.MemorySpace.SMEM),    # b3 scalar in SMEM
            ],
            out_specs=pl.BlockSpec((1, tm), lambda i: (0, i)),        # lane-dense store
        ),
        compiler_params=pltpu.CompilerParams(
            dimension_semantics=("parallel",)
        ),
    )(x_t, w1c, b1c, w2m, b2c, w3c, b3s)
    return out_t.reshape(N, 1)


def init_params(key, hidden=64):
    """Deterministic init mimicking PyTorch's default Linear init
    (uniform(-1/sqrt(fan_in), 1/sqrt(fan_in))). Weights stored as (in, out)."""
    ks = jax.random.split(key, 6)

    def uniform(k, shape, fan_in):
        bound = 1.0 / jnp.sqrt(jnp.float32(fan_in))
        return jax.random.uniform(k, shape, jnp.float32, -bound, bound)

    return {
        "w1": uniform(ks[0], (1, hidden), 1),
        "b1": uniform(ks[1], (hidden,), 1),
        "w2": uniform(ks[2], (hidden, hidden), hidden),
        "b2": uniform(ks[3], (hidden,), hidden),
        "w3": uniform(ks[4], (hidden, 1), hidden),
        "b3": uniform(ks[5], (1,), hidden),
    }


def reference_forward(x, params):
    h1 = jnp.maximum(x @ params["w1"] + params["b1"], 0.0)
    h2 = jnp.maximum(h1 @ params["w2"] + params["b2"], 0.0)
    return h2 @ params["w3"] + params["b3"]


if __name__ == "__main__":
    key = jax.random.PRNGKey(0)
    pkey, xkey = jax.random.split(key)

    params = init_params(pkey, hidden=64)

    # Small batch of scalar inputs, shape (N, 1) like the PyTorch module expects.
    N = 256
    x = jax.random.uniform(xkey, (N, 1), jnp.float32, -3.0, 3.0)

    out = neural_net_forward(x, params)
    out = jax.block_until_ready(out)

    ref = reference_forward(x, params)
    assert out.shape == (N, 1)
    assert jnp.allclose(out, ref, atol=1e-4, rtol=1e-5), "mismatch vs reference"

    print("KERNEL_OK")
</pallas_src>

<mosaic_0001>
module attributes {stable_mosaic.version = 11 : i64} {
  func.func @mlp_kernel(%arg0: i32, %arg1: memref<1x128xf32, #tpu.memory_space<vmem>>, %arg2: memref<64x1xf32, #tpu.memory_space<vmem>>, %arg3: memref<64x1xf32, #tpu.memory_space<vmem>>, %arg4: memref<64x64xf32, #tpu.memory_space<vmem>>, %arg5: memref<64x1xf32, #tpu.memory_space<vmem>>, %arg6: memref<64x1xf32, #tpu.memory_space<vmem>>, %arg7: memref<1xf32, #tpu.memory_space<smem>>, %arg8: memref<1x128xf32, #tpu.memory_space<vmem>>) attributes {dimension_semantics = [#tpu.dimension_semantics<parallel>], iteration_bounds = array<i64: 2>, scalar_prefetch = 0 : i64, scratch_operands = 0 : i64, tpu.core_type = #tpu.core_type<tc>, window_params = [{transform_indices = @transform_0, window_bounds = array<i64: 1, 128>}, {pipeline_mode = #tpu.pipeline_mode<synchronous>, transform_indices = @transform_1, window_bounds = array<i64: 64, 1>}, {pipeline_mode = #tpu.pipeline_mode<synchronous>, transform_indices = @transform_2, window_bounds = array<i64: 64, 1>}, {pipeline_mode = #tpu.pipeline_mode<synchronous>, transform_indices = @transform_3, window_bounds = array<i64: 64, 64>}, {pipeline_mode = #tpu.pipeline_mode<synchronous>, transform_indices = @transform_4, window_bounds = array<i64: 64, 1>}, {pipeline_mode = #tpu.pipeline_mode<synchronous>, transform_indices = @transform_5, window_bounds = array<i64: 64, 1>}, {transform_indices = @transform_6, window_bounds = array<i64: 1>}, {transform_indices = @transform_7, window_bounds = array<i64: 1, 128>}]} {
    %c0 = arith.constant 0 : index
    %c0_0 = arith.constant 0 : index
    %0 = vector.load %arg1[%c0, %c0_0] : memref<1x128xf32, #tpu.memory_space<vmem>>, vector<1x128xf32>
    %c0_1 = arith.constant 0 : index
    %c0_2 = arith.constant 0 : index
    %1 = vector.load %arg2[%c0_1, %c0_2] : memref<64x1xf32, #tpu.memory_space<vmem>>, vector<64x1xf32>
    %2 = vector.broadcast %1 : vector<64x1xf32> to vector<64x128xf32>
    %3 = vector.broadcast %0 : vector<1x128xf32> to vector<64x128xf32>
    %4 = arith.mulf %2, %3 : vector<64x128xf32>
    %c0_3 = arith.constant 0 : index
    %c0_4 = arith.constant 0 : index
    %5 = vector.load %arg3[%c0_3, %c0_4] : memref<64x1xf32, #tpu.memory_space<vmem>>, vector<64x1xf32>
    %6 = vector.broadcast %5 : vector<64x1xf32> to vector<64x128xf32>
    %7 = arith.addf %4, %6 : vector<64x128xf32>
    %cst = arith.constant 0.000000e+00 : f32
    %8 = vector.broadcast %cst : f32 to vector<64x128xf32>
    %9 = arith.maximumf %7, %8 : vector<64x128xf32>
    %c0_5 = arith.constant 0 : index
    %c0_6 = arith.constant 0 : index
    %10 = vector.load %arg4[%c0_5, %c0_6] : memref<64x64xf32, #tpu.memory_space<vmem>>, vector<64x64xf32>
    %cst_7 = arith.constant dense<0.000000e+00> : vector<64x128xf32>
    %11 = tpu.matmul %10, %9, %cst_7 {dimension_numbers = #tpu.dot_dimension_numbers<[1], [0], [0], [1], [0, 0, 1, 1], [], []>} : vector<64x64xf32>, vector<64x128xf32>, vector<64x128xf32> -> vector<64x128xf32>
    %c0_8 = arith.constant 0 : index
    %c0_9 = arith.constant 0 : index
    %12 = vector.load %arg5[%c0_8, %c0_9] : memref<64x1xf32, #tpu.memory_space<vmem>>, vector<64x1xf32>
    %13 = vector.broadcast %12 : vector<64x1xf32> to vector<64x128xf32>
    %14 = arith.addf %11, %13 : vector<64x128xf32>
    %cst_10 = arith.constant 0.000000e+00 : f32
    %15 = vector.broadcast %cst_10 : f32 to vector<64x128xf32>
    %16 = arith.maximumf %14, %15 : vector<64x128xf32>
    %c0_11 = arith.constant 0 : index
    %c0_12 = arith.constant 0 : index
    %17 = vector.load %arg6[%c0_11, %c0_12] : memref<64x1xf32, #tpu.memory_space<vmem>>, vector<64x1xf32>
    %18 = vector.broadcast %17 : vector<64x1xf32> to vector<64x128xf32>
    %19 = arith.mulf %18, %16 : vector<64x128xf32>
    %cst_13 = arith.constant dense<0.000000e+00> : vector<128xf32>
    %20 = vector.multi_reduction <add>, %19, %cst_13 [0] : vector<64x128xf32> to vector<128xf32>
    %21 = vector.shape_cast %20 : vector<128xf32> to vector<1x128xf32>
    %c0_14 = arith.constant 0 : index
    %22 = memref.load %arg7[%c0_14] : memref<1xf32, #tpu.memory_space<smem>>
    %23 = vector.broadcast %22 : f32 to vector<1x128xf32>
    %24 = arith.addf %21, %23 : vector<1x128xf32>
    %c0_15 = arith.constant 0 : index
    %c0_16 = arith.constant 0 : index
    %25 = vector.load %arg8[%c0_15, %c0_16] : memref<1x128xf32, #tpu.memory_space<vmem>>, vector<1x128xf32>
    tpu.vector_store %arg8[%c0_15, %c0_16], %24 {strides = array<i32>} : memref<1x128xf32, #tpu.memory_space<vmem>>, vector<1x128xf32>,
    return
  }
  func.func @transform_0(%arg0: i32) -> (i32, i32) {
    %c0_i32 = arith.constant 0 : i32
    %c0_i32_0 = arith.constant 0 : i32
    return %c0_i32, %arg0 : i32, i32
  }
  func.func @transform_1(%arg0: i32) -> (i32, i32) {
    %c0_i32 = arith.constant 0 : i32
    %c0_i32_0 = arith.constant 0 : i32
    %c0_i32_1 = arith.constant 0 : i32
    return %c0_i32, %c0_i32_0 : i32, i32
  }
  func.func @transform_2(%arg0: i32) -> (i32, i32) {
    %c0_i32 = arith.constant 0 : i32
    %c0_i32_0 = arith.constant 0 : i32
    %c0_i32_1 = arith.constant 0 : i32
    return %c0_i32, %c0_i32_0 : i32, i32
  }
  func.func @transform_3(%arg0: i32) -> (i32, i32) {
    %c0_i32 = arith.constant 0 : i32
    %c0_i32_0 = arith.constant 0 : i32
    %c0_i32_1 = arith.constant 0 : i32
    return %c0_i32, %c0_i32_0 : i32, i32
  }
  func.func @transform_4(%arg0: i32) -> (i32, i32) {
    %c0_i32 = arith.constant 0 : i32
    %c0_i32_0 = arith.constant 0 : i32
    %c0_i32_1 = arith.constant 0 : i32
    return %c0_i32, %c0_i32_0 : i32, i32
  }
  func.func @transform_5(%arg0: i32) -> (i32, i32) {
    %c0_i32 = arith.constant 0 : i32
    %c0_i32_0 = arith.constant 0 : i32
    %c0_i32_1 = arith.constant 0 : i32
    return %c0_i32, %c0_i32_0 : i32, i32
  }
  func.func @transform_6(%arg0: i32) -> i32 {
    %c0_i32 = arith.constant 0 : i32
    %c0_i32_0 = arith.constant 0 : i32
    return %c0_i32 : i32
  }
  func.func @transform_7(%arg0: i32) -> (i32, i32) {
    %c0_i32 = arith.constant 0 : i32
    %c0_i32_0 = arith.constant 0 : i32
    return %c0_i32, %arg0 : i32, i32
  }
}

</mosaic_0001>

<llo_original>
// kernel: tpu_custom_call.1
$region0: #{tpu_custom_call.1}
  #allocation0 [shape = 'u32[]', space=smem, size = 0x4, offset = 0x4, fixed_abs, tag = 'smem constant byte address 0x4 - core index']
  #allocation1 [shape = 'u32[144,128]{1,0:T(1,128)}', space=vmem, size = 0x12000, scoped, tag = 'internal scratch']
  #allocation2 [shape = 'f32[1]{0:T(128)S(6)}', space=smem, size = 0x200, scoped, tag = 'scoped memory for tpu_custom_call.1']
  %s0 = inlined_call_operand.vmem [shape: f32[1,256], index: 0, kind: input, shape index: {}]
  %s1 = inlined_call_operand.vmem [shape: f32[64,1], index: 1, kind: input, shape index: {}]
  %s2 = inlined_call_operand.vmem [shape: f32[64,1], index: 2, kind: input, shape index: {}]
  %s3 = inlined_call_operand.vmem [shape: f32[64,64], index: 3, kind: input, shape index: {}]
  %s4 = inlined_call_operand.vmem [shape: f32[64,1], index: 4, kind: input, shape index: {}]
  %s5 = inlined_call_operand.vmem [shape: f32[64,1], index: 5, kind: input, shape index: {}]
  %s6 = inlined_call_operand.<no memory space> [shape: f32[1], index: 6, kind: input, shape index: {}]
  %s7 = inlined_call_operand.hbm [shape: f32[1,256], index: 7, kind: output, shape index: {}]
  %s8 = sld [smem:[#allocation0]]
  $region61: #{tpu_custom_call.1} parent=0
    _
  %s10 = ssub.s32 1, %s8
  %s11 = scalar_select 0, %s10, %s8
  %12 = sst [smem:[#allocation2]] %s6
  $region1: #{tpu_custom_call.1} parent=0
    #allocation3 [shape = 'u8[1024]{0}', space=vmem, size = 0x400, scoped, tag = 'output window, operand 0']
    #allocation4 [shape = 's32[2]{0}', space=sflag, size = 0x8, scoped, tag = 'scoped memory for tpu_custom_call.1']
    %13 = vsyncpa [#allocation4], 0
    %s14 = scalar_lea.sflag [#allocation4], 1
    %15 = vsyncpa %s14, 0
    loop: start=0, step=1, limit=4
    $region2: #{tpu_custom_call.1} parent=1 // loop_pre_header
      _
    $region3: #{tpu_custom_call.1} parent=1 // loop_header
      %s17 = sphi 0, %s21
      %p18 = scmp.ge.s32.totalorder %s17, 4
      %s27 = sphi 0, %s29
      %s30 = sphi 0, %s27
      %s31 = sphi 0, %s30
      %s47 = sphi 0, %s31
      %s51 = sphi 0, %s51
      %s53 = sphi 0, %s51
      %s54 = sphi 0, %s53
      %s68 = sphi 0, %s54
      %s72 = sphi 0, %s72
      %s74 = sphi 0, %s72
      %s75 = sphi 0, %s74
      %s89 = sphi 0, %s75
      %s93 = sphi 0, %s93
      %s95 = sphi 0, %s93
      %s96 = sphi 0, %s95
      %s110 = sphi 0, %s96
      %s114 = sphi 0, %s114
      %s116 = sphi 0, %s114
      %s117 = sphi 0, %s116
      %s131 = sphi 0, %s117
      %s135 = sphi 0, %s135
      %s137 = sphi 0, %s135
      %s138 = sphi 0, %s137
      %s152 = sphi 0, %s138
      %s156 = sphi 0, %s156
      %s158 = sphi 0, %s156
      %s159 = sphi 0, %s158
      %s173 = sphi 0, %s159
      %s179 = sphi 0, %s181
      %s182 = sphi 0, %s179
      %s183 = sphi 0, %s182
      %s199 = sphi 0, %s183
    $region4: #{tpu_custom_call.1} parent=1 // loop_header_branch
      %20 = sbr.rel (%p18) target = $region8
    $region5: #{tpu_custom_call.1} parent=1 // loop_body
      %s22 = ssub.s32 %s17, 1
      %s23 = ssub.s32 %s17, 2
      %s24 = sadd.s32 %s17, 1
      %s25 = ssub.s32 %s17, %s24
      %p26 = scmp.eq.s32.totalorder %s25, 0
      %s28 = sadd.s32 %s27, 1
      %s29 = scalar_select %p26, %s27, %s28
      %p32 = pneg %p26
      %p33 = scmp.eq.s32.totalorder %s17, 1
      %p34 = por %p32, %p33
      %p35 = scmp.ne.s32.totalorder %s27, %s30
      %p36 = scmp.eq.s32.totalorder %s17, 0
      %p37 = por %p35, %p36
      %p38 = scmp.ne.s32.totalorder %s27, %s30
      %p39 = scmp.eq.s32.totalorder %s22, 1
      %p40 = por %p38, %p39
      %p41 = scmp.ne.s32.totalorder %s30, %s31
      %p42 = scmp.eq.s32.totalorder %s22, 0
      %p43 = por %p41, %p42
      %p44 = scmp.ne.s32.totalorder %s30, %s31
      %p45 = scmp.eq.s32.totalorder %s23, 1
      %p46 = por %p44, %p45
      %p48 = scmp.ne.s32.totalorder %s31, %s47
      %p49 = scmp.eq.s32.totalorder %s23, 0
      %p50 = por %p48, %p49
      %s52 = sadd.s32 %s51, 1
      %p55 = scmp.eq.s32.totalorder %s17, 1
      %p56 = scmp.ne.s32.totalorder %s51, %s53
      %p57 = scmp.eq.s32.totalorder %s17, 0
      %p58 = por %p56, %p57
      %p59 = scmp.ne.s32.totalorder %s51, %s53
      %p60 = scmp.eq.s32.totalorder %s22, 1
      %p61 = por %p59, %p60
      %p62 = scmp.ne.s32.totalorder %s53, %s54
      %p63 = scmp.eq.s32.totalorder %s22, 0
      %p64 = por %p62, %p63
      %p65 = scmp.ne.s32.totalorder %s53, %s54
      %p66 = scmp.eq.s32.totalorder %s23, 1
      %p67 = por %p65, %p66
      %p69 = scmp.ne.s32.totalorder %s54, %s68
      %p70 = scmp.eq.s32.totalorder %s23, 0
      %p71 = por %p69, %p70
      %s73 = sadd.s32 %s72, 1
      %p76 = scmp.eq.s32.totalorder %s17, 1
      %p77 = scmp.ne.s32.totalorder %s72, %s74
      %p78 = scmp.eq.s32.totalorder %s17, 0
      %p79 = por %p77, %p78
      %p80 = scmp.ne.s32.totalorder %s72, %s74
      %p81 = scmp.eq.s32.totalorder %s22, 1
      %p82 = por %p80, %p81
      %p83 = scmp.ne.s32.totalorder %s74, %s75
      %p84 = scmp.eq.s32.totalorder %s22, 0
      %p85 = por %p83, %p84
      %p86 = scmp.ne.s32.totalorder %s74, %s75
      %p87 = scmp.eq.s32.totalorder %s23, 1
      %p88 = por %p86, %p87
      %p90 = scmp.ne.s32.totalorder %s75, %s89
      %p91 = scmp.eq.s32.totalorder %s23, 0
      %p92 = por %p90, %p91
      %s94 = sadd.s32 %s93, 1
      %p97 = scmp.eq.s32.totalorder %s17, 1
      %p98 = scmp.ne.s32.totalorder %s93, %s95
      %p99 = scmp.eq.s32.totalorder %s17, 0
      %p100 = por %p98, %p99
      %p101 = scmp.ne.s32.totalorder %s93, %s95
      %p102 = scmp.eq.s32.totalorder %s22, 1
      %p103 = por %p101, %p102
      %p104 = scmp.ne.s32.totalorder %s95, %s96
      %p105 = scmp.eq.s32.totalorder %s22, 0
      %p106 = por %p104, %p105
      %p107 = scmp.ne.s32.totalorder %s95, %s96
      %p108 = scmp.eq.s32.totalorder %s23, 1
      %p109 = por %p107, %p108
      %p111 = scmp.ne.s32.totalorder %s96, %s110
      %p112 = scmp.eq.s32.totalorder %s23, 0
      %p113 = por %p111, %p112
      %s115 = sadd.s32 %s114, 1
      %p118 = scmp.eq.s32.totalorder %s17, 1
      %p119 = scmp.ne.s32.totalorder %s114, %s116
      %p120 = scmp.eq.s32.totalorder %s17, 0
      %p121 = por %p119, %p120
      %p122 = scmp.ne.s32.totalorder %s114, %s116
      %p123 = scmp.eq.s32.totalorder %s22, 1
      %p124 = por %p122, %p123
      %p125 = scmp.ne.s32.totalorder %s116, %s117
      %p126 = scmp.eq.s32.totalorder %s22, 0
      %p127 = por %p125, %p126
      %p128 = scmp.ne.s32.totalorder %s116, %s117
      %p129 = scmp.eq.s32.totalorder %s23, 1
      %p130 = por %p128, %p129
      %p132 = scmp.ne.s32.totalorder %s117, %s131
      %p133 = scmp.eq.s32.totalorder %s23, 0
      %p134 = por %p132, %p133
      %s136 = sadd.s32 %s135, 1
      %p139 = scmp.eq.s32.totalorder %s17, 1
      %p140 = scmp.ne.s32.totalorder %s135, %s137
      %p141 = scmp.eq.s32.totalorder %s17, 0
      %p142 = por %p140, %p141
      %p143 = scmp.ne.s32.totalorder %s135, %s137
      %p144 = scmp.eq.s32.totalorder %s22, 1
      %p145 = por %p143, %p144
      %p146 = scmp.ne.s32.totalorder %s137, %s138
      %p147 = scmp.eq.s32.totalorder %s22, 0
      %p148 = por %p146, %p147
      %p149 = scmp.ne.s32.totalorder %s137, %s138
      %p150 = scmp.eq.s32.totalorder %s23, 1
      %p151 = por %p149, %p150
      %p153 = scmp.ne.s32.totalorder %s138, %s152
      %p154 = scmp.eq.s32.totalorder %s23, 0
      %p155 = por %p153, %p154
      %s157 = sadd.s32 %s156, 1
      %p160 = scmp.eq.s32.totalorder %s17, 1
      %p161 = scmp.ne.s32.totalorder %s156, %s158
      %p162 = scmp.eq.s32.totalorder %s17, 0
      %p163 = por %p161, %p162
      %p164 = scmp.ne.s32.totalorder %s156, %s158
      %p165 = scmp.eq.s32.totalorder %s22, 1
      %p166 = por %p164, %p165
      %p167 = scmp.ne.s32.totalorder %s158, %s159
      %p168 = scmp.eq.s32.totalorder %s22, 0
      %p169 = por %p167, %p168
      %p170 = scmp.ne.s32.totalorder %s158, %s159
      %p171 = scmp.eq.s32.totalorder %s23, 1
      %p172 = por %p170, %p171
      %p174 = scmp.ne.s32.totalorder %s159, %s173
      %p175 = scmp.eq.s32.totalorder %s23, 0
      %p176 = por %p174, %p175
      %s177 = ssub.s32 %s17, %s24
      %p178 = scmp.eq.s32.totalorder %s177, 0
      %s180 = sadd.s32 %s179, 1
      %s181 = scalar_select %p178, %s179, %s180
      %p184 = pneg %p178
      %p185 = scmp.eq.s32.totalorder %s17, 1
      %p186 = por %p184, %p185
      %p187 = scmp.ne.s32.totalorder %s179, %s182
      %p188 = scmp.eq.s32.totalorder %s17, 0
      %p189 = por %p187, %p188
      %p190 = scmp.ne.s32.totalorder %s179, %s182
      %p191 = scmp.eq.s32.totalorder %s22, 1
      %p192 = por %p190, %p191
      %p193 = scmp.ne.s32.totalorder %s182, %s183
      %p194 = scmp.eq.s32.totalorder %s22, 0
      %p195 = por %p193, %p194
      %p196 = scmp.ne.s32.totalorder %s182, %s183
      %p197 = scmp.eq.s32.totalorder %s23, 1
      %p198 = por %p196, %p197
      %p200 = scmp.ne.s32.totalorder %s183, %s199
      %p201 = scmp.eq.s32.totalorder %s23, 0
      %p202 = por %p200, %p201
      %p203 = scmp.le.s32.totalorder 1, %s17
      %p204 = scmp.lt.s32.totalorder %s17, 3
      %p205 = pnand %p203, %p204
      %p206 = pneg %p205
      // Predicated region
      $region9: #{tpu_custom_call.1} parent=5 // pred_check
        _
      $region10: #{tpu_custom_call.1} parent=5 // pred_check_branch
        %208 = sbr.rel (%p205) target = $region12
      $region11: #{tpu_custom_call.1} parent=5 // pred_region
        %s209 = ssub.s32 %s17, 1
        // Predicated region
        $region13: #{tpu_custom_call.1} parent=11 // pred_check
          %p210 = pneg %p64
        $region14: #{tpu_custom_call.1} parent=11 // pred_check_branch
          %212 = sbr.rel (%p210) target = $region16
        $region15: #{tpu_custom_call.1} parent=11 // pred_region
          _
        $region16: #{tpu_custom_call.1} parent=11 // pred_fallthru
          _
        // Predicated region
        $region17: #{tpu_custom_call.1} parent=11 // pred_check
          %p213 = pneg %p85
        $region18: #{tpu_custom_call.1} parent=11 // pred_check_branch
          %215 = sbr.rel (%p213) target = $region20
        $region19: #{tpu_custom_call.1} parent=11 // pred_region
          _
        $region20: #{tpu_custom_call.1} parent=11 // pred_fallthru
          _
        // Predicated region
        $region21: #{tpu_custom_call.1} parent=11 // pred_check
          %p216 = pneg %p106
        $region22: #{tpu_custom_call.1} parent=11 // pred_check_branch
          %218 = sbr.rel (%p216) target = $region24
        $region23: #{tpu_custom_call.1} parent=11 // pred_region
          _
        $region24: #{tpu_custom_call.1} parent=11 // pred_fallthru
          _
        // Predicated region
        $region25: #{tpu_custom_call.1} parent=11 // pred_check
          %p219 = pneg %p127
        $region26: #{tpu_custom_call.1} parent=11 // pred_check_branch
          %221 = sbr.rel (%p219) target = $region28
        $region27: #{tpu_custom_call.1} parent=11 // pred_region
          _
        $region28: #{tpu_custom_call.1} parent=11 // pred_fallthru
          _
        // Predicated region
        $region29: #{tpu_custom_call.1} parent=11 // pred_check
          %p222 = pneg %p148
        $region30: #{tpu_custom_call.1} parent=11 // pred_check_branch
          %224 = sbr.rel (%p222) target = $region32
        $region31: #{tpu_custom_call.1} parent=11 // pred_region
          _
        $region32: #{tpu_custom_call.1} parent=11 // pred_fallthru
          _
        // Predicated region
        $region33: #{tpu_custom_call.1} parent=11 // pred_check
          %p225 = pneg %p169
        $region34: #{tpu_custom_call.1} parent=11 // pred_check_branch
          %227 = sbr.rel (%p225) target = $region36
        $region35: #{tpu_custom_call.1} parent=11 // pred_region
          _
        $region36: #{tpu_custom_call.1} parent=11 // pred_fallthru
          _
      $region12: #{tpu_custom_call.1} parent=5 // pred_fallthru
        _
      %p228 = scmp.lt.s32.totalorder %s17, 2
      // Predicated region
      $region37: #{tpu_custom_call.1} parent=5 // pred_check
        %p229 = pneg %p228
      $region38: #{tpu_custom_call.1} parent=5 // pred_check_branch
        %231 = sbr.rel (%p229) target = $region40
      $region39: #{tpu_custom_call.1} parent=5 // pred_region
        // Predicated region
        $region41: #{tpu_custom_call.1} parent=39 // pred_check
          %p232 = pneg %p37
        $region42: #{tpu_custom_call.1} parent=39 // pred_check_branch
          %234 = sbr.rel (%p232) target = $region44
        $region43: #{tpu_custom_call.1} parent=39 // pred_region
          %p235 = scmp.lt.s32.totalorder %s17, 1
          %s236 = scalar_select %p235, %s17, 1
          %s237 = scalar_lea.vmem %s0, %s236
        $region44: #{tpu_custom_call.1} parent=39 // pred_fallthru
          _
      $region40: #{tpu_custom_call.1} parent=5 // pred_fallthru
        _
      %p238 = scmp.le.s32.totalorder 1, %s17
      %p239 = scmp.lt.s32.totalorder %s17, 3
      %p240 = pnand %p238, %p239
      %p241 = pneg %p240
      // Predicated region
      $region45: #{tpu_custom_call.1} parent=5 // pred_check
        _
      $region46: #{tpu_custom_call.1} parent=5 // pred_check_branch
        %243 = sbr.rel (%p240) target = $region48
      $region47: #{tpu_custom_call.1} parent=5 // pred_region
        %s244 = ssub.s32 %s17, 1
        %p245 = scmp.lt.s32.totalorder %s22, 1
        %s246 = scalar_select %p245, %s22, 1
        %s247 = scalar_lea.vmem %s0, %s246
        %p248 = pneg %p43
        %p249 = pneg %p40
        %p250 = pneg %p64
        %p251 = pneg %p61
        %p252 = pneg %p85
        %p253 = pneg %p82
        %p254 = pneg %p106
        %p255 = pneg %p103
        %p256 = pneg %p127
        %p257 = pneg %p124
        %p258 = pneg %p148
        %p259 = pneg %p145
        %p260 = pneg %p169
        %p261 = pneg %p166
        %p262 = pneg %p195
        %p263 = pneg %p192
        %s264 = sand.u32 %s182, 1
        %s265 = scalar_lea.sflag [#allocation4], %s264
        %s266 = sand.u32 %s182, 1
        %s267 = scalar_lea.vmem [#allocation3], %s266
        %p268 = scmp.lt.s32.totalorder %s22, 1
        %s269 = scalar_select %p268, %s22, 1
        %s270 = scalar_lea.vmem %s0, %s269
        %v271 = vld [vmem:[%s270] sm:$0x1]
        %v272 = vld [vmem:[%s1] sm:$0xff]
        %v273 = vld [vmem:[%s1 + $0x8] sm:$0xff]
        %v274 = vld [vmem:[%s1 + $0x10] sm:$0xff]
        %v275 = vld [vmem:[%s1 + $0x18] sm:$0xff]
        %v276 = vld [vmem:[%s1 + $0x20] sm:$0xff]
        %v277 = vld [vmem:[%s1 + $0x28] sm:$0xff]
        %v278 = vld [vmem:[%s1 + $0x30] sm:$0xff]
        %v279 = vld [vmem:[%s1 + $0x38] sm:$0xff]
        %281 = vset.pattern.permute.xlu0 0
        %282 = vperm.xlu0 %281, %v272
        %v283 = vpop.permute.xlu0 %282
        %286 = vset.pattern.permute.xlu0 0
        %287 = vperm.xlu0 %286, %v273
        %v288 = vpop.permute.xlu0 %287
        %291 = vset.pattern.permute.xlu0 0
        %292 = vperm.xlu0 %291, %v274
        %v293 = vpop.permute.xlu0 %292
        %296 = vset.pattern.permute.xlu0 0
        %297 = vperm.xlu0 %296, %v275
        %v298 = vpop.permute.xlu0 %297
        %301 = vset.pattern.permute.xlu0 0
        %302 = vperm.xlu0 %301, %v276
        %v303 = vpop.permute.xlu0 %302
        %306 = vset.pattern.permute.xlu0 0
        %307 = vperm.xlu0 %306, %v277
        %v308 = vpop.permute.xlu0 %307
        %311 = vset.pattern.permute.xlu0 0
        %312 = vperm.xlu0 %311, %v278
        %v313 = vpop.permute.xlu0 %312
        %316 = vset.pattern.permute.xlu0 0
        %317 = vperm.xlu0 %316, %v279
        %v318 = vpop.permute.xlu0 %317
        %v321 = vlaneseq
        %v322 = vshrl.u32 %v321, 7
        %v323 = vsub.s32 0, %v322
        %v324 = vrot.slane %v271, %v323
        %v326 = vmul.f32 %v283, %v324
        %v327 = vmul.f32 %v288, %v324
        %v328 = vmul.f32 %v293, %v324
        %v329 = vmul.f32 %v298, %v324
        %v330 = vmul.f32 %v303, %v324
        %v331 = vmul.f32 %v308, %v324
        %v332 = vmul.f32 %v313, %v324
        %v333 = vmul.f32 %v318, %v324
        %v334 = vld [vmem:[%s2] sm:$0xff]
        %v335 = vld [vmem:[%s2 + $0x8] sm:$0xff]
        %v336 = vld [vmem:[%s2 + $0x10] sm:$0xff]
        %v337 = vld [vmem:[%s2 + $0x18] sm:$0xff]
        %v338 = vld [vmem:[%s2 + $0x20] sm:$0xff]
        %v339 = vld [vmem:[%s2 + $0x28] sm:$0xff]
        %v340 = vld [vmem:[%s2 + $0x30] sm:$0xff]
        %v341 = vld [vmem:[%s2 + $0x38] sm:$0xff]
        %343 = vset.pattern.permute.xlu0 0
        %344 = vperm.xlu0 %343, %v334
        %v345 = vpop.permute.xlu0 %344
        %348 = vset.pattern.permute.xlu0 0
        %349 = vperm.xlu0 %348, %v335
        %v350 = vpop.permute.xlu0 %349
        %353 = vset.pattern.permute.xlu0 0
        %354 = vperm.xlu0 %353, %v336
        %v355 = vpop.permute.xlu0 %354
        %358 = vset.pattern.permute.xlu0 0
        %359 = vperm.xlu0 %358, %v337
        %v360 = vpop.permute.xlu0 %359
        %363 = vset.pattern.permute.xlu0 0
        %364 = vperm.xlu0 %363, %v338
        %v365 = vpop.permute.xlu0 %364
        %368 = vset.pattern.permute.xlu0 0
        %369 = vperm.xlu0 %368, %v339
        %v370 = vpop.permute.xlu0 %369
        %373 = vset.pattern.permute.xlu0 0
        %374 = vperm.xlu0 %373, %v340
        %v375 = vpop.permute.xlu0 %374
        %378 = vset.pattern.permute.xlu0 0
        %379 = vperm.xlu0 %378, %v341
        %v380 = vpop.permute.xlu0 %379
        %v382 = vadd.f32 %v326, %v345
        %v383 = vadd.f32 %v327, %v350
        %v384 = vadd.f32 %v328, %v355
        %v385 = vadd.f32 %v329, %v360
        %v386 = vadd.f32 %v330, %v365
        %v387 = vadd.f32 %v331, %v370
        %v388 = vadd.f32 %v332, %v375
        %v389 = vadd.f32 %v333, %v380
        %v390 = vmax.f32 %v382, 0.0
        %v391 = vmax.f32 %v383, 0.0
        %v392 = vmax.f32 %v384, 0.0
        %v393 = vmax.f32 %v385, 0.0
        %v394 = vmax.f32 %v386, 0.0
        %v395 = vmax.f32 %v387, 0.0
        %v396 = vmax.f32 %v388, 0.0
        %v397 = vmax.f32 %v389, 0.0
        %v398 = vld [vmem:[%s3] sm:$0xff]
        %v399 = vld [vmem:[%s3 + $0x8] sm:$0xff]
        %v400 = vld [vmem:[%s3 + $0x10] sm:$0xff]
        %v401 = vld [vmem:[%s3 + $0x18] sm:$0xff]
        %v402 = vld [vmem:[%s3 + $0x20] sm:$0xff]
        %v403 = vld [vmem:[%s3 + $0x28] sm:$0xff]
        %v404 = vld [vmem:[%s3 + $0x30] sm:$0xff]
        %v405 = vld [vmem:[%s3 + $0x38] sm:$0xff]
        %v406 = vld [vmem:[%s4] sm:$0xff]
        %v407 = vld [vmem:[%s4 + $0x8] sm:$0xff]
        %v408 = vld [vmem:[%s4 + $0x10] sm:$0xff]
        %v409 = vld [vmem:[%s4 + $0x18] sm:$0xff]
        %v410 = vld [vmem:[%s4 + $0x20] sm:$0xff]
        %v411 = vld [vmem:[%s4 + $0x28] sm:$0xff]
        %v412 = vld [vmem:[%s4 + $0x30] sm:$0xff]
        %v413 = vld [vmem:[%s4 + $0x38] sm:$0xff]
        %415 = vset.pattern.permute.xlu0 0
        %416 = vperm.xlu0 %415, %v406
        %v417 = vpop.permute.xlu0 %416
        %420 = vset.pattern.permute.xlu0 0
        %421 = vperm.xlu0 %420, %v407
        %v422 = vpop.permute.xlu0 %421
        %425 = vset.pattern.permute.xlu0 0
        %426 = vperm.xlu0 %425, %v408
        %v427 = vpop.permute.xlu0 %426
        %430 = vset.pattern.permute.xlu0 0
        %431 = vperm.xlu0 %430, %v409
        %v432 = vpop.permute.xlu0 %431
        %435 = vset.pattern.permute.xlu0 0
        %436 = vperm.xlu0 %435, %v410
        %v437 = vpop.permute.xlu0 %436
        %440 = vset.pattern.permute.xlu0 0
        %441 = vperm.xlu0 %440, %v411
        %v442 = vpop.permute.xlu0 %441
        %445 = vset.pattern.permute.xlu0 0
        %446 = vperm.xlu0 %445, %v412
        %v447 = vpop.permute.xlu0 %446
        %450 = vset.pattern.permute.xlu0 0
        %451 = vperm.xlu0 %450, %v413
        %v452 = vpop.permute.xlu0 %451
        %vm454 = vcmask 523264
        %v456 = vsel %vm454, %v398, 0
        %v459 = vsel %vm454, %v399, 0
        %v462 = vsel %vm454, %v400, 0
        %v465 = vsel %vm454, %v401, 0
        %v468 = vsel %vm454, %v402, 0
        %v471 = vsel %vm454, %v403, 0
        %v474 = vsel %vm454, %v404, 0
        %v477 = vsel %vm454, %v405, 0
        %479 = vmatprep.subr.mxu0 0.0
        %480 = vmatpush1.msra.mxu0 %v390
        %481 = vmatprep.subr.mxu0 0.0
        %482 = vmatpush1.msra.mxu0 %v391
        %483 = vmatprep.subr.mxu0 0.0
        %484 = vmatpush1.msra.mxu0 %v392
        %485 = vmatprep.subr.mxu0 0.0
        %486 = vmatpush1.msra.mxu0 %v393
        %487 = vmatprep.subr.mxu0 0.0
        %488 = vmatpush1.msra.mxu0 %v394
        %489 = vmatprep.subr.mxu0 0.0
        %490 = vmatpush1.msra.mxu0 %v395
        %491 = vmatprep.subr.mxu0 0.0
        %492 = vmatpush1.msra.mxu0 %v396
        %493 = vmatprep.subr.mxu0 0.0
        %494 = vmatpush1.msra.mxu0 %v397
        %495 = vmatprep.subr.mxu0 0.0
        %496 = vmatpush1.msra.mxu0 0.0
        %497 = vmatprep.subr.mxu0 0.0
        %498 = vmatpush1.msra.mxu0 0.0
        %499 = vmatprep.subr.mxu0 0.0
        %500 = vmatpush1.msra.mxu0 0.0
        %501 = vmatprep.subr.mxu0 0.0
        %502 = vmatpush1.msra.mxu0 0.0
        %503 = vmatprep.subr.mxu0 0.0
        %504 = vmatpush1.msra.mxu0 0.0
        %505 = vmatprep.subr.mxu0 0.0
        %506 = vmatpush1.msra.mxu0 0.0
        %507 = vmatprep.subr.mxu0 0.0
        %508 = vmatpush1.msra.mxu0 0.0
        %509 = vmatprep.subr.mxu0 0.0
        %510 = vmatpush1.msra.mxu0 0.0
        %511 = vmatprep.subr.mxu0 0.0
        %512 = vmatpush1.msra.mxu0 0.0
        %513 = vmatprep.subr.mxu0 0.0
        %514 = vmatpush1.msra.mxu0 0.0
        %515 = vmatprep.subr.mxu0 0.0
        %516 = vmatpush1.msra.mxu0 0.0
        %517 = vmatprep.subr.mxu0 0.0
        %518 = vmatpush1.msra.mxu0 0.0
        %519 = vmatprep.subr.mxu0 0.0
        %520 = vmatpush1.msra.mxu0 0.0
        %521 = vmatprep.subr.mxu0 0.0
        %522 = vmatpush1.msra.mxu0 0.0
        %523 = vmatprep.subr.mxu0 0.0
        %524 = vmatpush1.msra.mxu0 0.0
        %525 = vmatprep.subr.mxu0 0.0
        %526 = vmatpush1.msra.mxu0 0.0
        %527 = vmatprep.subr.mxu0 0.0
        %528 = vmatpush1.msra.mxu0 0.0
        %529 = vmatprep.subr.mxu0 0.0
        %530 = vmatpush1.msra.mxu0 0.0
        %531 = vmatprep.subr.mxu0 0.0
        %532 = vmatpush1.msra.mxu0 0.0
        %533 = vmatprep.subr.mxu0 0.0
        %534 = vmatpush1.msra.mxu0 0.0
        %535 = vmatprep.subr.mxu0 0.0
        %536 = vmatpush1.msra.mxu0 0.0
        %537 = vmatprep.subr.mxu0 0.0
        %538 = vmatpush1.msra.mxu0 0.0
        %539 = vmatprep.subr.mxu0 0.0
        %540 = vmatpush1.msra.mxu0 0.0
        %541 = vmatprep.subr.mxu0 0.0
        %542 = vmatpush1.msra.mxu0 0.0
        %543 = vmatprep.mubr.f32.mxu0 0.0
        %544 = vmatmul.mubr.f32.gmra.mrb[0].mxu0 %v456
        %v545 = vpop.f32.mrb[0].mxu0
        %v546 = vadd.f32 %v417, %v545
        %v547 = vpop.f32.mrb[0].mxu0
        %548 = vmatprep.mubr.f32.mxu0 0.0
        %549 = vmatmul.mubr.f32.gmra.mrb[0].mxu0 %v459
        %v550 = vpop.f32.mrb[0].mxu0
        %v551 = vadd.f32 %v422, %v550
        %v552 = vpop.f32.mrb[0].mxu0
        %553 = vmatprep.mubr.f32.mxu0 0.0
        %554 = vmatmul.mubr.f32.gmra.mrb[0].mxu0 %v462
        %v555 = vpop.f32.mrb[0].mxu0
        %v556 = vadd.f32 %v427, %v555
        %v557 = vpop.f32.mrb[0].mxu0
        %558 = vmatprep.mubr.f32.mxu0 0.0
        %559 = vmatmul.mubr.f32.gmra.mrb[0].mxu0 %v465
        %v560 = vpop.f32.mrb[0].mxu0
        %v561 = vadd.f32 %v432, %v560
        %v562 = vpop.f32.mrb[0].mxu0
        %563 = vmatprep.mubr.f32.mxu0 0.0
        %564 = vmatmul.mubr.f32.gmra.mrb[0].mxu0 %v468
        %v565 = vpop.f32.mrb[0].mxu0
        %v566 = vadd.f32 %v437, %v565
        %v567 = vpop.f32.mrb[0].mxu0
        %568 = vmatprep.mubr.f32.mxu0 0.0
        %569 = vmatmul.mubr.f32.gmra.mrb[0].mxu0 %v471
        %v570 = vpop.f32.mrb[0].mxu0
        %v571 = vadd.f32 %v442, %v570
        %v572 = vpop.f32.mrb[0].mxu0
        %573 = vmatprep.mubr.f32.mxu0 0.0
        %574 = vmatmul.mubr.f32.gmra.mrb[0].mxu0 %v474
        %v575 = vpop.f32.mrb[0].mxu0
        %v576 = vadd.f32 %v447, %v575
        %v577 = vpop.f32.mrb[0].mxu0
        %578 = vmatprep.mubr.f32.mxu0 0.0
        %579 = vmatmul.mubr.f32.gmra.mrb[0].mxu0 %v477
        %v580 = vpop.f32.mrb[0].mxu0
        %v581 = vadd.f32 %v452, %v580
        %v582 = vpop.f32.mrb[0].mxu0
        %583 = vdwg.mxu0
        %v584 = vmax.f32 %v546, 0.0
        %v585 = vmax.f32 %v551, 0.0
        %v586 = vmax.f32 %v556, 0.0
        %v587 = vmax.f32 %v561, 0.0
        %v588 = vmax.f32 %v566, 0.0
        %v589 = vmax.f32 %v571, 0.0
        %v590 = vmax.f32 %v576, 0.0
        %v591 = vmax.f32 %v581, 0.0
        %v592 = vld [vmem:[%s5] sm:$0xff]
        %v593 = vld [vmem:[%s5 + $0x8] sm:$0xff]
        %v594 = vld [vmem:[%s5 + $0x10] sm:$0xff]
        %v595 = vld [vmem:[%s5 + $0x18] sm:$0xff]
        %v596 = vld [vmem:[%s5 + $0x20] sm:$0xff]
        %v597 = vld [vmem:[%s5 + $0x28] sm:$0xff]
        %v598 = vld [vmem:[%s5 + $0x30] sm:$0xff]
        %v599 = vld [vmem:[%s5 + $0x38] sm:$0xff]
        %601 = vset.pattern.permute.xlu0 0
        %602 = vperm.xlu0 %601, %v592
        %v603 = vpop.permute.xlu0 %602
        %606 = vset.pattern.permute.xlu0 0
        %607 = vperm.xlu0 %606, %v593
        %v608 = vpop.permute.xlu0 %607
        %611 = vset.pattern.permute.xlu0 0
        %612 = vperm.xlu0 %611, %v594
        %v613 = vpop.permute.xlu0 %612
        %616 = vset.pattern.permute.xlu0 0
        %617 = vperm.xlu0 %616, %v595
        %v618 = vpop.permute.xlu0 %617
        %621 = vset.pattern.permute.xlu0 0
        %622 = vperm.xlu0 %621, %v596
        %v623 = vpop.permute.xlu0 %622
        %626 = vset.pattern.permute.xlu0 0
        %627 = vperm.xlu0 %626, %v597
        %v628 = vpop.permute.xlu0 %627
        %631 = vset.pattern.permute.xlu0 0
        %632 = vperm.xlu0 %631, %v598
        %v633 = vpop.permute.xlu0 %632
        %636 = vset.pattern.permute.xlu0 0
        %637 = vperm.xlu0 %636, %v599
        %v638 = vpop.permute.xlu0 %637
        %v640 = vmul.f32 %v603, %v584
        %v641 = vmul.f32 %v608, %v585
        %v642 = vmul.f32 %v613, %v586
        %v643 = vmul.f32 %v618, %v587
        %v644 = vmul.f32 %v623, %v588
        %v645 = vmul.f32 %v628, %v589
        %v646 = vmul.f32 %v633, %v590
        %v647 = vmul.f32 %v638, %v591
        %v648 = vadd.f32 %v640, %v641
        %v649 = vadd.f32 %v648, %v642
        %v650 = vadd.f32 %v649, %v643
        %v651 = vadd.f32 %v650, %v644
        %v652 = vadd.f32 %v651, %v645
        %v653 = vadd.f32 %v652, %v646
        %v654 = vadd.f32 %v653, %v647
        %v655 = vrot.slane %v654, 4
        %v656 = vadd.f32 %v654, %v655
        %v657 = vrot.slane %v656, 2
        %v658 = vadd.f32 %v656, %v657
        %v659 = vrot.slane %v658, 1
        %v660 = vadd.f32 %v658, %v659
        %s661 = sld [smem:[#allocation2]]
        %v662 = vstv %s661
        %v663 = vadd.f32 %v660, %v662
        %664 = vst [vmem:[%s267] sm:$0x1] %v663
        %s665 = sand.u32 %s182, 1
        %s666 = scalar_lea.sflag [#allocation4], %s665
        %s667 = sand.u32 %s182, 1
        %s668 = scalar_lea.vmem [#allocation3], %s667
        // Predicated region
        $region49: #{tpu_custom_call.1} parent=47 // pred_check
          %p669 = pneg %p192
        $region50: #{tpu_custom_call.1} parent=47 // pred_check_branch
          %671 = sbr.rel (%p669) target = $region52
        $region51: #{tpu_custom_call.1} parent=47 // pred_region
          %s673 = ssub.s32 16, 16
          %674 = vsyncadd %s666, %s673
          %s675 = smul.addr %s22, 16
          %s676 = scalar_lea.hbm %s7, %s675
          %s678 = sshll.u32 %s668, 4
          %s679 = int_to_ptr.vmem [resolvable:$true] %s678
          %681 = dma.vmem_to_hbm [thread:$0]  %s679, 16, %s676, %s666
        $region52: #{tpu_custom_call.1} parent=47 // pred_fallthru
          _
      $region48: #{tpu_custom_call.1} parent=5 // pred_fallthru
        _
      %p682 = scmp.le.s32.totalorder 2, %s17
      // Predicated region
      $region53: #{tpu_custom_call.1} parent=5 // pred_check
        %p683 = pneg %p682
      $region54: #{tpu_custom_call.1} parent=5 // pred_check_branch
        %685 = sbr.rel (%p683) target = $region56
      $region55: #{tpu_custom_call.1} parent=5 // pred_region
        %s686 = ssub.s32 %s17, 2
        // Predicated region
        $region57: #{tpu_custom_call.1} parent=55 // pred_check
          %p687 = pneg %p198
        $region58: #{tpu_custom_call.1} parent=55 // pred_check_branch
          %689 = sbr.rel (%p687) target = $region60
        $region59: #{tpu_custom_call.1} parent=55 // pred_region
          %s690 = sand.u32 %s183, 1
          %s691 = scalar_lea.sflag [#allocation4], %s690
          %s692 = sand.u32 %s183, 1
          %s693 = scalar_lea.vmem [#allocation3], %s692
          %694 = dma.done %s691, 16
        $region60: #{tpu_custom_call.1} parent=55 // pred_fallthru
          _
      $region56: #{tpu_custom_call.1} parent=5 // pred_fallthru
        _
    $region6: #{tpu_custom_call.1} parent=1 // loop_footer
      %s21 = sadd.s32 1, %s17
    $region7: #{tpu_custom_call.1} parent=1 // loop_footer_branch
      %16 = sbr.rel target = $region3
    $region8: #{tpu_custom_call.1} parent=1 // loop_exit
      _
    %695 = vsyncpa [#allocation4], 1
    %s696 = scalar_lea.sflag [#allocation4], 1
    %697 = vsyncpa %s696, 1

</llo_original>
